<compile_context>
chip_gen: v7x
topology: tpu7x:2x2x1
jax: 0.10.0
libtpu: 0.0.40
codegen_flags: <defaults>
</compile_context>

<pallas_src>
import math

import jax
import jax.numpy as jnp
from jax.experimental import pallas as pl
from jax.experimental.pallas import tpu as pltpu


# ---------------------------------------------------------------------------
# Helpers
# ---------------------------------------------------------------------------
def _vmem_capacity_bytes():
    try:
        return int(pltpu.get_tpu_info().vmem_capacity_bytes)
    except Exception:
        return 64 * 1024 * 1024          # conservative default (v7x per-core)


def _pick_fold(d1, s):
    """Smallest f with (d1 * f) % 128 == 0 and s % f == 0 (lane-dense out)."""
    if d1 % 128 == 0:
        return 1
    f0 = 128 // math.gcd(d1, 128)        # any valid fold is a multiple of f0
    f = f0
    while f <= s:
        if s % f == 0:
            return f
        f += f0
    # TODO(synk): no fold divides S; padding S would cost a full extra copy of
    # x, so fall back to fold=1 (masked stores on a <128-lane last dim).
    return 1


def _pick_tile_rows(n_rows, max_rows):
    """Sequence-tile height: multiple of 8 (or the full extent) <= max_rows,
    preferring one that divides n_rows so there is no ragged last tile."""
    if n_rows <= max_rows or n_rows <= 8:
        return n_rows
    top = (min(max_rows, n_rows) // 8) * 8
    t = top
    while t >= 8:
        if n_rows % t == 0:
            return t
        t -= 8
    return top      # ragged last tile; Pallas masks the tail (still correct)


# ---------------------------------------------------------------------------
# Kernels
# ---------------------------------------------------------------------------
def _film_fused_kernel(x_ref, z_ref, w1_ref, b1_ref, w2_ref, b2_ref,
                       o_ref, beta_ref):
    # beta(z) once per batch row (s == 0); the tiny MXU/EUP work is hidden
    # under the first x-tile DMA. Kept in f32 VMEM across all s-tiles.
    @pl.when(pl.program_id(1) == 0)
    def _():
        zb = z_ref[0]                                             # (1, D2)
        h = jnp.dot(zb, w1_ref[...],
                    preferred_element_type=jnp.float32) + b1_ref[...]
        h = h * jax.nn.sigmoid(h)                                 # SiLU
        beta_ref[...] = jnp.dot(h, w2_ref[...],
                                preferred_element_type=jnp.float32) + b2_ref[...]
    # Memory-bound broadcast add (f32 accumulate, cast only on the store).
    o_ref[...] = (x_ref[...] + beta_ref[...]).astype(o_ref.dtype)


def _add_kernel(x_ref, beta_ref, o_ref):
    o_ref[...] = (x_ref[...] + beta_ref[...]).astype(o_ref.dtype)


# ---------------------------------------------------------------------------
# Wrapper
# ---------------------------------------------------------------------------
def concat_film(x, z, w1, b1, w2, b2, *, donate_x=False, tile_bytes=None):
    """x: (B, S, D1), z: (B, 1, D2). Weights stored (in, out), biases (1, out)."""
    B, S, D1 = x.shape
    _, _, D2 = z.shape
    H = w1.shape[1]
    itemsize = jnp.dtype(x.dtype).itemsize

    # ---- lane-dense fold: output last dim a multiple of 128 ----------------
    fold = _pick_fold(D1, S)
    S_l, DL = S // fold, D1 * fold
    x_l = x.reshape(B, S_l, DL)                 # contiguous reshape: no copy
    if fold > 1:
        # Fold the second Linear's output dim instead of retiling in-kernel:
        # beta comes out of the matmul already at width DL.
        w2_eff = jnp.tile(w2, (1, fold))        # (H, DL)  -- tiny
        b2_eff = jnp.tile(b2, (1, fold))        # (1, DL)
    else:
        w2_eff, b2_eff = w2, b2

    # ---- VMEM budget / sequence tiling --------------------------------------
    vmem_cap = _vmem_capacity_bytes()
    # x tile + out tile, each double-buffered => 4x the per-tile budget
    # resident.  Cap the budget at vmem_cap/8 so residency stays <= vmem_cap/2
    # (16 MiB tiles on 128 MiB v5e/v6e, 8 MiB tiles on 64 MiB v7x).
    budget = vmem_cap // 8 if tile_bytes is None else int(tile_bytes)
    budget = min(max(budget, 1), vmem_cap // 8)
    row_bytes = DL * itemsize
    # floor of 8 rows = minimum legal block; the vmem limit below is computed
    # from the ACTUAL tile, so a very wide row can never silently overshoot.
    max_rows = max(8, (budget // row_bytes) // 8 * 8)

    fuse_beta = B >= 2
    if not fuse_beta and S_l >= 32:
        # B == 1: both grid axes are "parallel"; keep >= 4 sequence tiles so
        # v7x's two TensorCores both stream x (load-balanced).
        max_rows = min(max_rows, max(8, (S_l // 4) // 8 * 8))

    TS = _pick_tile_rows(S_l, max_rows)
    n_s = pl.cdiv(S_l, TS)
    grid = (B, n_s)

    # ---- explicit VMEM accounting (Mosaic limit consistent with usage) -----
    tile_resident = 4 * TS * DL * itemsize                  # x + out, 2x buffered
    small_resident = 8 * (D2 + D2 * H + H + H * DL + DL) * 4 + DL * 4
    vmem_limit = int(min(vmem_cap,
                         max(16 * 1024 * 1024,
                             tile_resident + small_resident + 4 * 1024 * 1024)))

    # Alias x -> out only when the caller truly donates x AND the tiling is
    # exact; otherwise XLA would insert a defensive full copy (~2x traffic).
    aliases = {0: 0} if (donate_x and S_l % TS == 0) else {}

    cost = pl.CostEstimate(
        flops=2 * B * (D2 * H + H * DL) + B * S * D1,
        transcendentals=B * H,
        bytes_accessed=2 * B * S * D1 * itemsize + B * D2 * itemsize,
    )

    x_spec = pl.BlockSpec((1, TS, DL), lambda b, s: (b, s, 0))
    out_spec = pl.BlockSpec((1, TS, DL), lambda b, s: (b, s, 0))
    out_shape = jax.ShapeDtypeStruct((B, S_l, DL), x.dtype)

    if fuse_beta:
        out_l = pl.pallas_call(
            _film_fused_kernel,
            out_shape=out_shape,
            grid=grid,
            in_specs=[
                x_spec,                                            # x (streamed)
                pl.BlockSpec((1, 1, D2), lambda b, s: (b, 0, 0)),  # z (per-b)
                pl.BlockSpec((D2, H), lambda b, s: (0, 0)),        # w1 (resident)
                pl.BlockSpec((1, H), lambda b, s: (0, 0)),         # b1
                pl.BlockSpec((H, DL), lambda b, s: (0, 0)),        # w2 (folded)
                pl.BlockSpec((1, DL), lambda b, s: (0, 0)),        # b2 (folded)
            ],
            out_specs=out_spec,
            scratch_shapes=[pltpu.VMEM((1, DL), jnp.float32)],     # beta (f32)
            compiler_params=pltpu.CompilerParams(
                dimension_semantics=("parallel", "arbitrary"),
                vmem_limit_bytes=vmem_limit),
            cost_estimate=cost,
            input_output_aliases=aliases,
        )(x_l, z, w1, b1, w2_eff, b2_eff)
    else:
        # B == 1: the tiny MLP is cheaper as plain XLA (fuses for free, no
        # launch); both grid axes stay "parallel" for megacore occupancy.
        h = jnp.einsum("bod,dh->boh", z, w1,
                       preferred_element_type=jnp.float32) + b1
        h = h * jax.nn.sigmoid(h)
        beta = jnp.einsum("boh,hd->bod", h, w2_eff,
                          preferred_element_type=jnp.float32) + b2_eff  # (B,1,DL) f32
        out_l = pl.pallas_call(
            _add_kernel,
            out_shape=out_shape,
            grid=grid,
            in_specs=[
                x_spec,                                            # x (streamed)
                pl.BlockSpec((1, 1, DL), lambda b, s: (b, 0, 0)),  # beta (resident)
            ],
            out_specs=out_spec,
            compiler_params=pltpu.CompilerParams(
                dimension_semantics=("parallel", "parallel"),
                vmem_limit_bytes=vmem_limit),
            cost_estimate=cost,
            input_output_aliases=aliases,
        )(x_l, beta)

    return out_l.reshape(B, S, D1)


def concat_film_reference(x, z, w1, b1, w2, b2):
    h = jnp.einsum("bod,dh->boh", z, w1) + b1
    h = h * jax.nn.sigmoid(h)
    beta = jnp.einsum("boh,hd->bod", h, w2) + b2
    return x + beta


if __name__ == "__main__":
    B, S = 2, 8
    x_size, z_size, hidden_size = 32, 16, 32

    key = jax.random.PRNGKey(0)
    kx, kz, k1, k2, k3, k4 = jax.random.split(key, 6)

    x = jax.random.normal(kx, (B, S, x_size), dtype=jnp.float32)
    z = jax.random.normal(kz, (B, 1, z_size), dtype=jnp.float32)

    # PyTorch Linear weights stored transposed as (in, out); biases as (1, out).
    w1 = jax.random.normal(k1, (z_size, hidden_size), dtype=jnp.float32) * 0.1
    b1 = jax.random.normal(k2, (1, hidden_size), dtype=jnp.float32) * 0.1
    w2 = jax.random.normal(k3, (hidden_size, x_size), dtype=jnp.float32) * 0.1
    b2 = jax.random.normal(k4, (1, x_size), dtype=jnp.float32) * 0.1

    # Fused path (B >= 2).
    out = jax.block_until_ready(concat_film(x, z, w1, b1, w2, b2))
    ref = concat_film_reference(x, z, w1, b1, w2, b2)
    assert out.shape == (B, S, x_size)
    assert jnp.allclose(out, ref, atol=1e-5, rtol=1e-5), "fused path mismatch"

    # B == 1 path (plain-XLA beta, fully parallel grid) is also exercised.
    x1 = jax.random.normal(kx, (1, 64, x_size), dtype=jnp.float32)
    z1 = jax.random.normal(kz, (1, 1, z_size), dtype=jnp.float32)
    out1 = jax.block_until_ready(concat_film(x1, z1, w1, b1, w2, b2))
    ref1 = concat_film_reference(x1, z1, w1, b1, w2, b2)
    assert jnp.allclose(out1, ref1, atol=1e-5, rtol=1e-5), "add path mismatch"

    print("KERNEL_OK")
</pallas_src>

<mosaic_0001>
module attributes {stable_mosaic.version = 11 : i64} {
  func.func @_film_fused_kernel(%arg0: i32, %arg1: i32, %arg2: memref<1x2x128xf32, #tpu.memory_space<vmem>>, %arg3: memref<1x1x16xf32, #tpu.memory_space<vmem>>, %arg4: memref<16x32xf32, #tpu.memory_space<vmem>>, %arg5: memref<1x32xf32, #tpu.memory_space<vmem>>, %arg6: memref<32x128xf32, #tpu.memory_space<vmem>>, %arg7: memref<1x128xf32, #tpu.memory_space<vmem>>, %arg8: memref<1x2x128xf32, #tpu.memory_space<vmem>>, %arg9: memref<1x128xf32, #tpu.memory_space<vmem>>) attributes {dimension_semantics = [#tpu.dimension_semantics<parallel>, #tpu.dimension_semantics<arbitrary>], iteration_bounds = array<i64: 2, 1>, scalar_prefetch = 0 : i64, scratch_operands = 1 : i64, tpu.core_type = #tpu.core_type<tc>, window_params = [{transform_indices = @transform_0, window_bounds = array<i64: 1, 2, 128>}, {transform_indices = @transform_1, window_bounds = array<i64: 1, 1, 16>}, {pipeline_mode = #tpu.pipeline_mode<synchronous>, transform_indices = @transform_2, window_bounds = array<i64: 16, 32>}, {pipeline_mode = #tpu.pipeline_mode<synchronous>, transform_indices = @transform_3, window_bounds = array<i64: 1, 32>}, {pipeline_mode = #tpu.pipeline_mode<synchronous>, transform_indices = @transform_4, window_bounds = array<i64: 32, 128>}, {pipeline_mode = #tpu.pipeline_mode<synchronous>, transform_indices = @transform_5, window_bounds = array<i64: 1, 128>}, {transform_indices = @transform_6, window_bounds = array<i64: 1, 2, 128>}]} {
    %c0_i32 = arith.constant 0 : i32
    %0 = arith.cmpi eq, %arg1, %c0_i32 : i32
    %1 = arith.extui %0 : i1 to i32
    %c0_i32_0 = arith.constant 0 : i32
    %2 = arith.cmpi ne, %1, %c0_i32_0 : i32
    scf.if %2 {
      %c0_8 = arith.constant 0 : index
      %c0_9 = arith.constant 0 : index
      %c0_10 = arith.constant 0 : index
      %9 = vector.load %arg3[%c0_8, %c0_9, %c0_10] : memref<1x1x16xf32, #tpu.memory_space<vmem>>, vector<1x1x16xf32>
      %10 = vector.shape_cast %9 : vector<1x1x16xf32> to vector<1x16xf32>
      %c0_11 = arith.constant 0 : index
      %c0_12 = arith.constant 0 : index
      %11 = vector.load %arg4[%c0_11, %c0_12] : memref<16x32xf32, #tpu.memory_space<vmem>>, vector<16x32xf32>
      %cst = arith.constant dense<0.000000e+00> : vector<1x32xf32>
      %12 = tpu.matmul %10, %11, %cst {dimension_numbers = #tpu.dot_dimension_numbers<[1], [0], [0], [1], [0, 0, 1, 1], [], []>} : vector<1x16xf32>, vector<16x32xf32>, vector<1x32xf32> -> vector<1x32xf32>
      %c0_13 = arith.constant 0 : index
      %c0_14 = arith.constant 0 : index
      %13 = vector.load %arg5[%c0_13, %c0_14] : memref<1x32xf32, #tpu.memory_space<vmem>>, vector<1x32xf32>
      %14 = arith.addf %12, %13 : vector<1x32xf32>
      %15 = arith.negf %14 : vector<1x32xf32>
      %16 = math.exp %15 : vector<1x32xf32>
      %cst_15 = arith.constant 1.000000e+00 : f32
      %17 = vector.broadcast %cst_15 : f32 to vector<1x32xf32>
      %18 = arith.addf %17, %16 : vector<1x32xf32>
      %19 = arith.divf %17, %18 : vector<1x32xf32>
      %20 = arith.mulf %14, %19 : vector<1x32xf32>
      %c0_16 = arith.constant 0 : index
      %c0_17 = arith.constant 0 : index
      %21 = vector.load %arg6[%c0_16, %c0_17] : memref<32x128xf32, #tpu.memory_space<vmem>>, vector<32x128xf32>
      %cst_18 = arith.constant dense<0.000000e+00> : vector<1x128xf32>
      %22 = tpu.matmul %20, %21, %cst_18 {dimension_numbers = #tpu.dot_dimension_numbers<[1], [0], [0], [1], [0, 0, 1, 1], [], []>} : vector<1x32xf32>, vector<32x128xf32>, vector<1x128xf32> -> vector<1x128xf32>
      %c0_19 = arith.constant 0 : index
      %c0_20 = arith.constant 0 : index
      %23 = vector.load %arg7[%c0_19, %c0_20] : memref<1x128xf32, #tpu.memory_space<vmem>>, vector<1x128xf32>
      %24 = arith.addf %22, %23 : vector<1x128xf32>
      %c0_21 = arith.constant 0 : index
      %c0_22 = arith.constant 0 : index
      %25 = vector.load %arg9[%c0_21, %c0_22] : memref<1x128xf32, #tpu.memory_space<vmem>>, vector<1x128xf32>
      tpu.vector_store %arg9[%c0_21, %c0_22], %24 {strides = array<i32>} : memref<1x128xf32, #tpu.memory_space<vmem>>, vector<1x128xf32>,
    } else {
    }
    %c0 = arith.constant 0 : index
    %c0_1 = arith.constant 0 : index
    %c0_2 = arith.constant 0 : index
    %3 = vector.load %arg2[%c0, %c0_1, %c0_2] : memref<1x2x128xf32, #tpu.memory_space<vmem>>, vector<1x2x128xf32>
    %c0_3 = arith.constant 0 : index
    %c0_4 = arith.constant 0 : index
    %4 = vector.load %arg9[%c0_3, %c0_4] : memref<1x128xf32, #tpu.memory_space<vmem>>, vector<1x128xf32>
    %5 = vector.shape_cast %4 : vector<1x128xf32> to vector<1x1x128xf32>
    %6 = vector.broadcast %5 : vector<1x1x128xf32> to vector<1x2x128xf32>
    %7 = arith.addf %3, %6 : vector<1x2x128xf32>
    %c0_5 = arith.constant 0 : index
    %c0_6 = arith.constant 0 : index
    %c0_7 = arith.constant 0 : index
    %8 = vector.load %arg8[%c0_5, %c0_6, %c0_7] : memref<1x2x128xf32, #tpu.memory_space<vmem>>, vector<1x2x128xf32>
    tpu.vector_store %arg8[%c0_5, %c0_6, %c0_7], %7 {strides = array<i32>} : memref<1x2x128xf32, #tpu.memory_space<vmem>>, vector<1x2x128xf32>,
    return
  }
  func.func @transform_0(%arg0: i32, %arg1: i32) -> (i32, i32, i32) {
    %c0_i32 = arith.constant 0 : i32
    %c0_i32_0 = arith.constant 0 : i32
    return %arg0, %arg1, %c0_i32 : i32, i32, i32
  }
  func.func @transform_1(%arg0: i32, %arg1: i32) -> (i32, i32, i32) {
    %c0_i32 = arith.constant 0 : i32
    %c0_i32_0 = arith.constant 0 : i32
    %c0_i32_1 = arith.constant 0 : i32
    return %arg0, %c0_i32, %c0_i32_0 : i32, i32, i32
  }
  func.func @transform_2(%arg0: i32, %arg1: i32) -> (i32, i32) {
    %c0_i32 = arith.constant 0 : i32
    %c0_i32_0 = arith.constant 0 : i32
    %c0_i32_1 = arith.constant 0 : i32
    return %c0_i32, %c0_i32_0 : i32, i32
  }
  func.func @transform_3(%arg0: i32, %arg1: i32) -> (i32, i32) {
    %c0_i32 = arith.constant 0 : i32
    %c0_i32_0 = arith.constant 0 : i32
    %c0_i32_1 = arith.constant 0 : i32
    return %c0_i32, %c0_i32_0 : i32, i32
  }
  func.func @transform_4(%arg0: i32, %arg1: i32) -> (i32, i32) {
    %c0_i32 = arith.constant 0 : i32
    %c0_i32_0 = arith.constant 0 : i32
    %c0_i32_1 = arith.constant 0 : i32
    return %c0_i32, %c0_i32_0 : i32, i32
  }
  func.func @transform_5(%arg0: i32, %arg1: i32) -> (i32, i32) {
    %c0_i32 = arith.constant 0 : i32
    %c0_i32_0 = arith.constant 0 : i32
    %c0_i32_1 = arith.constant 0 : i32
    return %c0_i32, %c0_i32_0 : i32, i32
  }
  func.func @transform_6(%arg0: i32, %arg1: i32) -> (i32, i32, i32) {
    %c0_i32 = arith.constant 0 : i32
    %c0_i32_0 = arith.constant 0 : i32
    return %arg0, %arg1, %c0_i32 : i32, i32, i32
  }
}

</mosaic_0001>

<llo_original>
// kernel: tpu_custom_call.1
$region0: #{tpu_custom_call.1}
  #allocation0 [shape = 'u32[]', space=smem, size = 0x4, offset = 0x4, fixed_abs, tag = 'smem constant byte address 0x4 - core index']
  #allocation1 [shape = 'u32[144,128]{1,0:T(1,128)}', space=vmem, size = 0x12000, scoped, tag = 'internal scratch']
  #allocation2 [shape = 'f32[1,128]{1,0:T(1,128)}', space=vmem, size = 0x200, scoped, tag = 'scratch operand']
  %s0 = inlined_call_operand.hbm [shape: f32[2,2,128], index: 0, kind: input, shape index: {}]
  %s1 = inlined_call_operand.vmem [shape: f32[2,1,16], index: 1, kind: input, shape index: {}]
  %s2 = inlined_call_operand.hbm [shape: f32[16,32], index: 2, kind: input, shape index: {}]
  %s3 = inlined_call_operand.vmem [shape: f32[1,32], index: 3, kind: input, shape index: {}]
  %s4 = inlined_call_operand.hbm [shape: f32[32,128], index: 4, kind: input, shape index: {}]
  %s5 = inlined_call_operand.vmem [shape: f32[1,128], index: 5, kind: input, shape index: {}]
  %s6 = inlined_call_operand.hbm [shape: f32[2,2,128], index: 6, kind: output, shape index: {}]
  %s7 = sld [smem:[#allocation0]]
  $region73: #{tpu_custom_call.1} parent=0
    _
  %s9 = ssub.s32 1, %s7
  %s10 = scalar_select 0, %s9, %s7
  $region1: #{tpu_custom_call.1} parent=0
    #allocation3 [shape = 'u8[2048]{0}', space=vmem, size = 0x800, scoped, tag = 'input window, operand 0']
    #allocation4 [shape = 's32[2]{0}', space=sflag, size = 0x8, scoped, tag = 'scoped memory for tpu_custom_call.1']
    #allocation5 [shape = 's32[2]{0}', space=sflag, size = 0x8, scoped, tag = 'scoped memory for tpu_custom_call.1']
    #allocation6 [shape = 'u8[8192]{0}', space=vmem, size = 0x2000, scoped, tag = 'input window, operand 2, single buffered']
    #allocation7 [shape = 's32[1]{0}', space=sflag, size = 0x4, scoped, tag = 'scoped memory for tpu_custom_call.1']
    #allocation8 [shape = 'u8[16384]{0}', space=vmem, size = 0x4000, scoped, tag = 'input window, operand 4, single buffered']
    #allocation9 [shape = 'u8[2048]{0}', space=vmem, size = 0x800, scoped, tag = 'output window, operand 0']
    %11 = vsyncpa [#allocation4], 0
    %s12 = scalar_lea.sflag [#allocation4], 1
    %13 = vsyncpa %s12, 0
    %14 = vsyncpa [#allocation7], 0
    %15 = vsyncpa [#allocation5], 0
    %s16 = scalar_lea.sflag [#allocation5], 1
    %17 = vsyncpa %s16, 0
    loop: start=0, step=1, limit=4
    $region2: #{tpu_custom_call.1} parent=1 // loop_pre_header
      _
    $region3: #{tpu_custom_call.1} parent=1 // loop_header
      %s19 = sphi 0, %s23
      %p20 = scmp.ge.s32.totalorder %s19, 4
      %s26 = sphi 0, %s38
      %s27 = sphi 0, %s34
      %s28 = sphi 0, %s26
      %s29 = sphi 0, %s27
      %s30 = sphi 0, %s28
      %s31 = sphi 0, %s29
      %s43 = sphi 0, %s45
      %s46 = sphi 0, %s43
      %s47 = sphi 0, %s46
      %s63 = sphi 0, %s47
      %s69 = sphi 0, %s71
      %s72 = sphi 0, %s69
      %s73 = sphi 0, %s72
      %s89 = sphi 0, %s73
      %s93 = sphi 0, %s93
      %s95 = sphi 0, %s93
      %s96 = sphi 0, %s95
      %s110 = sphi 0, %s96
      %s114 = sphi 0, %s114
      %s116 = sphi 0, %s114
      %s117 = sphi 0, %s116
      %s131 = sphi 0, %s117
      %s135 = sphi 0, %s135
      %s137 = sphi 0, %s135
      %s138 = sphi 0, %s137
      %s152 = sphi 0, %s138
      %s156 = sphi 0, %s156
      %s158 = sphi 0, %s156
      %s159 = sphi 0, %s158
      %s173 = sphi 0, %s159
      %s181 = sphi 0, %s183
      %s184 = sphi 0, %s181
      %s185 = sphi 0, %s184
      %s201 = sphi 0, %s185
    $region4: #{tpu_custom_call.1} parent=1 // loop_header_branch
      %22 = sbr.rel (%p20) target = $region8
    $region5: #{tpu_custom_call.1} parent=1 // loop_body
      %s24 = ssub.s32 %s19, 1
      %s25 = ssub.s32 %s19, 2
      %s32 = sadd.s32 1, %s27
      %p33 = scmp.ge.s32.totalorder %s32, 1
      %s34 = scalar_select %p33, 0, %s32
      %s35 = sadd.s32 1, %s26
      %s36 = scalar_select %p33, %s35, %s26
      %p37 = scmp.ge.s32.totalorder %s36, 2
      %s38 = scalar_select %p37, 0, %s36
      %s39 = ssub.s32 %s26, %s38
      %s40 = ssub.s32 %s27, %s34
      %s41 = sor.u32 %s39, %s40
      %p42 = scmp.eq.s32.totalorder %s41, 0
      %s44 = sadd.s32 %s43, 1
      %s45 = scalar_select %p42, %s43, %s44
      %p48 = pneg %p42
      %p49 = scmp.eq.s32.totalorder %s19, 1
      %p50 = por %p48, %p49
      %p51 = scmp.ne.s32.totalorder %s43, %s46
      %p52 = scmp.eq.s32.totalorder %s19, 0
      %p53 = por %p51, %p52
      %p54 = scmp.ne.s32.totalorder %s43, %s46
      %p55 = scmp.eq.s32.totalorder %s24, 1
      %p56 = por %p54, %p55
      %p57 = scmp.ne.s32.totalorder %s46, %s47
      %p58 = scmp.eq.s32.totalorder %s24, 0
      %p59 = por %p57, %p58
      %p60 = scmp.ne.s32.totalorder %s46, %s47
      %p61 = scmp.eq.s32.totalorder %s25, 1
      %p62 = por %p60, %p61
      %p64 = scmp.ne.s32.totalorder %s47, %s63
      %p65 = scmp.eq.s32.totalorder %s25, 0
      %p66 = por %p64, %p65
      %s67 = ssub.s32 %s26, %s38
      %p68 = scmp.eq.s32.totalorder %s67, 0
      %s70 = sadd.s32 %s69, 1
      %s71 = scalar_select %p68, %s69, %s70
      %p74 = pneg %p68
      %p75 = scmp.eq.s32.totalorder %s19, 1
      %p76 = por %p74, %p75
      %p77 = scmp.ne.s32.totalorder %s69, %s72
      %p78 = scmp.eq.s32.totalorder %s19, 0
      %p79 = por %p77, %p78
      %p80 = scmp.ne.s32.totalorder %s69, %s72
      %p81 = scmp.eq.s32.totalorder %s24, 1
      %p82 = por %p80, %p81
      %p83 = scmp.ne.s32.totalorder %s72, %s73
      %p84 = scmp.eq.s32.totalorder %s24, 0
      %p85 = por %p83, %p84
      %p86 = scmp.ne.s32.totalorder %s72, %s73
      %p87 = scmp.eq.s32.totalorder %s25, 1
      %p88 = por %p86, %p87
      %p90 = scmp.ne.s32.totalorder %s73, %s89
      %p91 = scmp.eq.s32.totalorder %s25, 0
      %p92 = por %p90, %p91
      %s94 = sadd.s32 %s93, 1
      %p97 = scmp.eq.s32.totalorder %s19, 1
      %p98 = scmp.ne.s32.totalorder %s93, %s95
      %p99 = scmp.eq.s32.totalorder %s19, 0
      %p100 = por %p98, %p99
      %p101 = scmp.ne.s32.totalorder %s93, %s95
      %p102 = scmp.eq.s32.totalorder %s24, 1
      %p103 = por %p101, %p102
      %p104 = scmp.ne.s32.totalorder %s95, %s96
      %p105 = scmp.eq.s32.totalorder %s24, 0
      %p106 = por %p104, %p105
      %p107 = scmp.ne.s32.totalorder %s95, %s96
      %p108 = scmp.eq.s32.totalorder %s25, 1
      %p109 = por %p107, %p108
      %p111 = scmp.ne.s32.totalorder %s96, %s110
      %p112 = scmp.eq.s32.totalorder %s25, 0
      %p113 = por %p111, %p112
      %s115 = sadd.s32 %s114, 1
      %p118 = scmp.eq.s32.totalorder %s19, 1
      %p119 = scmp.ne.s32.totalorder %s114, %s116
      %p120 = scmp.eq.s32.totalorder %s19, 0
      %p121 = por %p119, %p120
      %p122 = scmp.ne.s32.totalorder %s114, %s116
      %p123 = scmp.eq.s32.totalorder %s24, 1
      %p124 = por %p122, %p123
      %p125 = scmp.ne.s32.totalorder %s116, %s117
      %p126 = scmp.eq.s32.totalorder %s24, 0
      %p127 = por %p125, %p126
      %p128 = scmp.ne.s32.totalorder %s116, %s117
      %p129 = scmp.eq.s32.totalorder %s25, 1
      %p130 = por %p128, %p129
      %p132 = scmp.ne.s32.totalorder %s117, %s131
      %p133 = scmp.eq.s32.totalorder %s25, 0
      %p134 = por %p132, %p133
      %s136 = sadd.s32 %s135, 1
      %p139 = scmp.eq.s32.totalorder %s19, 1
      %p140 = scmp.ne.s32.totalorder %s135, %s137
      %p141 = scmp.eq.s32.totalorder %s19, 0
      %p142 = por %p140, %p141
      %p143 = scmp.ne.s32.totalorder %s135, %s137
      %p144 = scmp.eq.s32.totalorder %s24, 1
      %p145 = por %p143, %p144
      %p146 = scmp.ne.s32.totalorder %s137, %s138
      %p147 = scmp.eq.s32.totalorder %s24, 0
      %p148 = por %p146, %p147
      %p149 = scmp.ne.s32.totalorder %s137, %s138
      %p150 = scmp.eq.s32.totalorder %s25, 1
      %p151 = por %p149, %p150
      %p153 = scmp.ne.s32.totalorder %s138, %s152
      %p154 = scmp.eq.s32.totalorder %s25, 0
      %p155 = por %p153, %p154
      %s157 = sadd.s32 %s156, 1
      %p160 = scmp.eq.s32.totalorder %s19, 1
      %p161 = scmp.ne.s32.totalorder %s156, %s158
      %p162 = scmp.eq.s32.totalorder %s19, 0
      %p163 = por %p161, %p162
      %p164 = scmp.ne.s32.totalorder %s156, %s158
      %p165 = scmp.eq.s32.totalorder %s24, 1
      %p166 = por %p164, %p165
      %p167 = scmp.ne.s32.totalorder %s158, %s159
      %p168 = scmp.eq.s32.totalorder %s24, 0
      %p169 = por %p167, %p168
      %p170 = scmp.ne.s32.totalorder %s158, %s159
      %p171 = scmp.eq.s32.totalorder %s25, 1
      %p172 = por %p170, %p171
      %p174 = scmp.ne.s32.totalorder %s159, %s173
      %p175 = scmp.eq.s32.totalorder %s25, 0
      %p176 = por %p174, %p175
      %s177 = ssub.s32 %s26, %s38
      %s178 = ssub.s32 %s27, %s34
      %s179 = sor.u32 %s177, %s178
      %p180 = scmp.eq.s32.totalorder %s179, 0
      %s182 = sadd.s32 %s181, 1
      %s183 = scalar_select %p180, %s181, %s182
      %p186 = pneg %p180
      %p187 = scmp.eq.s32.totalorder %s19, 1
      %p188 = por %p186, %p187
      %p189 = scmp.ne.s32.totalorder %s181, %s184
      %p190 = scmp.eq.s32.totalorder %s19, 0
      %p191 = por %p189, %p190
      %p192 = scmp.ne.s32.totalorder %s181, %s184
      %p193 = scmp.eq.s32.totalorder %s24, 1
      %p194 = por %p192, %p193
      %p195 = scmp.ne.s32.totalorder %s184, %s185
      %p196 = scmp.eq.s32.totalorder %s24, 0
      %p197 = por %p195, %p196
      %p198 = scmp.ne.s32.totalorder %s184, %s185
      %p199 = scmp.eq.s32.totalorder %s25, 1
      %p200 = por %p198, %p199
      %p202 = scmp.ne.s32.totalorder %s185, %s201
      %p203 = scmp.eq.s32.totalorder %s25, 0
      %p204 = por %p202, %p203
      %p205 = scmp.le.s32.totalorder 1, %s19
      %p206 = scmp.lt.s32.totalorder %s19, 3
      %p207 = pnand %p205, %p206
      %p208 = pneg %p207
      // Predicated region
      $region9: #{tpu_custom_call.1} parent=5 // pred_check
        _
      $region10: #{tpu_custom_call.1} parent=5 // pred_check_branch
        %210 = sbr.rel (%p207) target = $region12
      $region11: #{tpu_custom_call.1} parent=5 // pred_region
        %s211 = ssub.s32 %s19, 1
        // Predicated region
        $region13: #{tpu_custom_call.1} parent=11 // pred_check
          %p212 = pneg %p106
        $region14: #{tpu_custom_call.1} parent=11 // pred_check_branch
          %214 = sbr.rel (%p212) target = $region16
        $region15: #{tpu_custom_call.1} parent=11 // pred_region
          %s216 = ssub.s32 256, 256
          %217 = vsyncadd [#allocation7], %s216
          %s218 = sshll.u32 [#allocation6], 4
          %s219 = int_to_ptr.vmem [resolvable:$true] %s218
          %224 = dma.hbm_to_vmem [thread:$0]  %s2, 256, %s219, [#allocation7], 128, 128, 8
        $region16: #{tpu_custom_call.1} parent=11 // pred_fallthru
          _
        // Predicated region
        $region17: #{tpu_custom_call.1} parent=11 // pred_check
          %p225 = pneg %p127
        $region18: #{tpu_custom_call.1} parent=11 // pred_check_branch
          %227 = sbr.rel (%p225) target = $region20
        $region19: #{tpu_custom_call.1} parent=11 // pred_region
          _
        $region20: #{tpu_custom_call.1} parent=11 // pred_fallthru
          _
        // Predicated region
        $region21: #{tpu_custom_call.1} parent=11 // pred_check
          %p228 = pneg %p148
        $region22: #{tpu_custom_call.1} parent=11 // pred_check_branch
          %230 = sbr.rel (%p228) target = $region24
        $region23: #{tpu_custom_call.1} parent=11 // pred_region
          %s232 = ssub.s32 512, 512
          %233 = vsyncadd [#allocation7], %s232
          %s234 = sshll.u32 [#allocation8], 4
          %s235 = int_to_ptr.vmem [resolvable:$true] %s234
          %240 = dma.hbm_to_vmem [thread:$0]  %s4, 512, %s235, [#allocation7], 128, 128, 8
        $region24: #{tpu_custom_call.1} parent=11 // pred_fallthru
          _
        // Predicated region
        $region25: #{tpu_custom_call.1} parent=11 // pred_check
          %p241 = pneg %p169
        $region26: #{tpu_custom_call.1} parent=11 // pred_check_branch
          %243 = sbr.rel (%p241) target = $region28
        $region27: #{tpu_custom_call.1} parent=11 // pred_region
          _
        $region28: #{tpu_custom_call.1} parent=11 // pred_fallthru
          _
      $region12: #{tpu_custom_call.1} parent=5 // pred_fallthru
        _
      %p244 = scmp.lt.s32.totalorder %s19, 2
      // Predicated region
      $region29: #{tpu_custom_call.1} parent=5 // pred_check
        %p245 = pneg %p244
      $region30: #{tpu_custom_call.1} parent=5 // pred_check_branch
        %247 = sbr.rel (%p245) target = $region32
      $region31: #{tpu_custom_call.1} parent=5 // pred_region
        // Predicated region
        $region33: #{tpu_custom_call.1} parent=31 // pred_check
          %p248 = pneg %p53
        $region34: #{tpu_custom_call.1} parent=31 // pred_check_branch
          %250 = sbr.rel (%p248) target = $region36
        $region35: #{tpu_custom_call.1} parent=31 // pred_region
          %s251 = sand.u32 %s43, 1
          %s252 = scalar_lea.sflag [#allocation4], %s251
          %s253 = sand.u32 %s43, 1
          %s254 = smul.addr %s253, 2
          %s255 = scalar_lea.vmem [#allocation3], %s254
          %s257 = ssub.s32 32, 32
          %258 = vsyncadd %s252, %s257
          %s259 = sadd.s32 %s27, %s26
          %s260 = smul.addr %s259, 32
          %s261 = scalar_lea.hbm %s0, %s260
          %s263 = sshll.u32 %s255, 4
          %s264 = int_to_ptr.vmem [resolvable:$true] %s263
          %266 = dma.hbm_to_vmem [thread:$0]  %s261, 32, %s264, %s252
        $region36: #{tpu_custom_call.1} parent=31 // pred_fallthru
          _
        // Predicated region
        $region37: #{tpu_custom_call.1} parent=31 // pred_check
          %p267 = pneg %p79
        $region38: #{tpu_custom_call.1} parent=31 // pred_check_branch
          %269 = sbr.rel (%p267) target = $region40
        $region39: #{tpu_custom_call.1} parent=31 // pred_region
          %p270 = scmp.lt.s32.totalorder %s26, 1
          %s271 = scalar_select %p270, %s26, 1
          %s272 = scalar_lea.vmem %s1, %s271
        $region40: #{tpu_custom_call.1} parent=31 // pred_fallthru
          _
      $region32: #{tpu_custom_call.1} parent=5 // pred_fallthru
        _
      %p273 = scmp.le.s32.totalorder 1, %s19
      %p274 = scmp.lt.s32.totalorder %s19, 3
      %p275 = pnand %p273, %p274
      %p276 = pneg %p275
      // Predicated region
      $region41: #{tpu_custom_call.1} parent=5 // pred_check
        _
      $region42: #{tpu_custom_call.1} parent=5 // pred_check_branch
        %278 = sbr.rel (%p275) target = $region44
      $region43: #{tpu_custom_call.1} parent=5 // pred_region
        %s279 = ssub.s32 %s19, 1
        %s280 = sand.u32 %s46, 1
        %s281 = scalar_lea.sflag [#allocation4], %s280
        %s282 = sand.u32 %s46, 1
        %s283 = smul.addr %s282, 2
        %s284 = scalar_lea.vmem [#allocation3], %s283
        // Predicated region
        $region45: #{tpu_custom_call.1} parent=43 // pred_check
          %p285 = pneg %p59
        $region46: #{tpu_custom_call.1} parent=43 // pred_check_branch
          %287 = sbr.rel (%p285) target = $region48
        $region47: #{tpu_custom_call.1} parent=43 // pred_region
          %288 = dma.done %s281, 32
        $region48: #{tpu_custom_call.1} parent=43 // pred_fallthru
          _
        // Predicated region
        $region49: #{tpu_custom_call.1} parent=43 // pred_check
          %p289 = pneg %p106
        $region50: #{tpu_custom_call.1} parent=43 // pred_check_branch
          %291 = sbr.rel (%p289) target = $region52
        $region51: #{tpu_custom_call.1} parent=43 // pred_region
          %292 = dma.done [#allocation7], 256
        $region52: #{tpu_custom_call.1} parent=43 // pred_fallthru
          _
        // Predicated region
        $region53: #{tpu_custom_call.1} parent=43 // pred_check
          %p293 = pneg %p148
        $region54: #{tpu_custom_call.1} parent=43 // pred_check_branch
          %295 = sbr.rel (%p293) target = $region56
        $region55: #{tpu_custom_call.1} parent=43 // pred_region
          %296 = dma.done [#allocation7], 512
        $region56: #{tpu_custom_call.1} parent=43 // pred_fallthru
          _
        %s297 = sand.u32 %s46, 1
        %s298 = scalar_lea.sflag [#allocation4], %s297
        %s299 = sand.u32 %s46, 1
        %s300 = smul.addr %s299, 2
        %s301 = scalar_lea.vmem [#allocation3], %s300
        %p302 = pneg %p59
        %p303 = pneg %p56
        %p304 = scmp.lt.s32.totalorder %s28, 1
        %s305 = scalar_select %p304, %s28, 1
        %s306 = scalar_lea.vmem %s1, %s305
        %p307 = pneg %p85
        %p308 = pneg %p82
        %p309 = pneg %p106
        %p310 = pneg %p103
        %p311 = pneg %p127
        %p312 = pneg %p124
        %p313 = pneg %p148
        %p314 = pneg %p145
        %p315 = pneg %p169
        %p316 = pneg %p166
        %p317 = pneg %p197
        %p318 = pneg %p194
        %s319 = sand.u32 %s184, 1
        %s320 = scalar_lea.sflag [#allocation5], %s319
        %s321 = sand.u32 %s184, 1
        %s322 = smul.addr %s321, 2
        %s323 = scalar_lea.vmem [#allocation9], %s322
        %p324 = scmp.lt.s32.totalorder %s28, 1
        %s325 = scalar_select %p324, %s28, 1
        %s326 = scalar_lea.vmem %s1, %s325
        %p327 = scmp.eq.s32.totalorder %s29, 0
        // Predicated region
        $region57: #{tpu_custom_call.1} parent=43 // pred_check
          %p328 = pneg %p327
        $region58: #{tpu_custom_call.1} parent=43 // pred_check_branch
          %330 = sbr.rel (%p328) target = $region60
        $region59: #{tpu_custom_call.1} parent=43 // pred_region
          %v331 = vld [vmem:[%s326] sm:$0x1]
          %v332 = vld [vmem:[#allocation6] sm:$0xff]
          %v333 = vld [vmem:[#allocation6 + $0x8] sm:$0xff]
          %v334 = vld [vmem:[%s3] sm:$0x1]
          %vm335 = vcmask 130048
          %v337 = vsel %vm335, %v331, 0
          %339 = vmatprep.subr.mxu0 0.0
          %340 = vmatpush1.msra.mxu0 %v332
          %341 = vmatprep.subr.mxu0 0.0
          %342 = vmatpush1.msra.mxu0 %v333
          %343 = vmatprep.subr.mxu0 0.0
          %344 = vmatpush1.msra.mxu0 0.0
          %345 = vmatprep.subr.mxu0 0.0
          %346 = vmatpush1.msra.mxu0 0.0
          %347 = vmatprep.subr.mxu0 0.0
          %348 = vmatpush1.msra.mxu0 0.0
          %349 = vmatprep.subr.mxu0 0.0
          %350 = vmatpush1.msra.mxu0 0.0
          %351 = vmatprep.subr.mxu0 0.0
          %352 = vmatpush1.msra.mxu0 0.0
          %353 = vmatprep.subr.mxu0 0.0
          %354 = vmatpush1.msra.mxu0 0.0
          %355 = vmatprep.subr.mxu0 0.0
          %356 = vmatpush1.msra.mxu0 0.0
          %357 = vmatprep.subr.mxu0 0.0
          %358 = vmatpush1.msra.mxu0 0.0
          %359 = vmatprep.subr.mxu0 0.0
          %360 = vmatpush1.msra.mxu0 0.0
          %361 = vmatprep.subr.mxu0 0.0
          %362 = vmatpush1.msra.mxu0 0.0
          %363 = vmatprep.subr.mxu0 0.0
          %364 = vmatpush1.msra.mxu0 0.0
          %365 = vmatprep.subr.mxu0 0.0
          %366 = vmatpush1.msra.mxu0 0.0
          %367 = vmatprep.subr.mxu0 0.0
          %368 = vmatpush1.msra.mxu0 0.0
          %369 = vmatprep.subr.mxu0 0.0
          %370 = vmatpush1.msra.mxu0 0.0
          %371 = vmatprep.subr.mxu0 0.0
          %372 = vmatpush1.msra.mxu0 0.0
          %373 = vmatprep.subr.mxu0 0.0
          %374 = vmatpush1.msra.mxu0 0.0
          %375 = vmatprep.subr.mxu0 0.0
          %376 = vmatpush1.msra.mxu0 0.0
          %377 = vmatprep.subr.mxu0 0.0
          %378 = vmatpush1.msra.mxu0 0.0
          %379 = vmatprep.subr.mxu0 0.0
          %380 = vmatpush1.msra.mxu0 0.0
          %381 = vmatprep.subr.mxu0 0.0
          %382 = vmatpush1.msra.mxu0 0.0
          %383 = vmatprep.subr.mxu0 0.0
          %384 = vmatpush1.msra.mxu0 0.0
          %385 = vmatprep.subr.mxu0 0.0
          %386 = vmatpush1.msra.mxu0 0.0
          %387 = vmatprep.subr.mxu0 0.0
          %388 = vmatpush1.msra.mxu0 0.0
          %389 = vmatprep.subr.mxu0 0.0
          %390 = vmatpush1.msra.mxu0 0.0
          %391 = vmatprep.subr.mxu0 0.0
          %392 = vmatpush1.msra.mxu0 0.0
          %393 = vmatprep.subr.mxu0 0.0
          %394 = vmatpush1.msra.mxu0 0.0
          %395 = vmatprep.subr.mxu0 0.0
          %396 = vmatpush1.msra.mxu0 0.0
          %397 = vmatprep.subr.mxu0 0.0
          %398 = vmatpush1.msra.mxu0 0.0
          %399 = vmatprep.subr.mxu0 0.0
          %400 = vmatpush1.msra.mxu0 0.0
          %401 = vmatprep.subr.mxu0 0.0
          %402 = vmatpush1.msra.mxu0 0.0
          %403 = vmatprep.mubr.f32.mxu0 0.0
          %404 = vmatmul.mubr.f32.gmra.mrb[0].mxu0 %v337
          %v405 = vpop.f32.mrb[0].mxu0
          %v406 = vadd.f32 %v334, %v405
          %v407 = vpop.f32.mrb[0].mxu0
          %408 = vdwg.mxu0
          %v409 = vxor.u32 %v406, 2147483648
          %v410 = vmul.f32 %v409, 1.442695
          %v411 = vpow.pop %v410
          %v412 = vadd.f32 %v411, 1.0
          %v413 = vrcp.pop %v412
          %v414 = vmul.f32 1.0, %v413
          %v415 = vmul.f32 %v406, %v414
          %v416 = vld [vmem:[#allocation8] sm:$0xff]
          %v417 = vld [vmem:[#allocation8 + $0x8] sm:$0xff]
          %v418 = vld [vmem:[#allocation8 + $0x10] sm:$0xff]
          %v419 = vld [vmem:[#allocation8 + $0x18] sm:$0xff]
          %v420 = vld [vmem:[%s5] sm:$0x1]
          %vm421 = vcmask 261120
          %v423 = vsel %vm421, %v415, 0
          %425 = vmatprep.subr.mxu0 0.0
          %426 = vmatpush1.msra.mxu0 %v416
          %427 = vmatprep.subr.mxu0 0.0
          %428 = vmatpush1.msra.mxu0 %v417
          %429 = vmatprep.subr.mxu0 0.0
          %430 = vmatpush1.msra.mxu0 %v418
          %431 = vmatprep.subr.mxu0 0.0
          %432 = vmatpush1.msra.mxu0 %v419
          %433 = vmatprep.subr.mxu0 0.0
          %434 = vmatpush1.msra.mxu0 0.0
          %435 = vmatprep.subr.mxu0 0.0
          %436 = vmatpush1.msra.mxu0 0.0
          %437 = vmatprep.subr.mxu0 0.0
          %438 = vmatpush1.msra.mxu0 0.0
          %439 = vmatprep.subr.mxu0 0.0
          %440 = vmatpush1.msra.mxu0 0.0
          %441 = vmatprep.subr.mxu0 0.0
          %442 = vmatpush1.msra.mxu0 0.0
          %443 = vmatprep.subr.mxu0 0.0
          %444 = vmatpush1.msra.mxu0 0.0
          %445 = vmatprep.subr.mxu0 0.0
          %446 = vmatpush1.msra.mxu0 0.0
          %447 = vmatprep.subr.mxu0 0.0
          %448 = vmatpush1.msra.mxu0 0.0
          %449 = vmatprep.subr.mxu0 0.0
          %450 = vmatpush1.msra.mxu0 0.0
          %451 = vmatprep.subr.mxu0 0.0
          %452 = vmatpush1.msra.mxu0 0.0
          %453 = vmatprep.subr.mxu0 0.0
          %454 = vmatpush1.msra.mxu0 0.0
          %455 = vmatprep.subr.mxu0 0.0
          %456 = vmatpush1.msra.mxu0 0.0
          %457 = vmatprep.subr.mxu0 0.0
          %458 = vmatpush1.msra.mxu0 0.0
          %459 = vmatprep.subr.mxu0 0.0
          %460 = vmatpush1.msra.mxu0 0.0
          %461 = vmatprep.subr.mxu0 0.0
          %462 = vmatpush1.msra.mxu0 0.0
          %463 = vmatprep.subr.mxu0 0.0
          %464 = vmatpush1.msra.mxu0 0.0
          %465 = vmatprep.subr.mxu0 0.0
          %466 = vmatpush1.msra.mxu0 0.0
          %467 = vmatprep.subr.mxu0 0.0
          %468 = vmatpush1.msra.mxu0 0.0
          %469 = vmatprep.subr.mxu0 0.0
          %470 = vmatpush1.msra.mxu0 0.0
          %471 = vmatprep.subr.mxu0 0.0
          %472 = vmatpush1.msra.mxu0 0.0
          %473 = vmatprep.subr.mxu0 0.0
          %474 = vmatpush1.msra.mxu0 0.0
          %475 = vmatprep.subr.mxu0 0.0
          %476 = vmatpush1.msra.mxu0 0.0
          %477 = vmatprep.subr.mxu0 0.0
          %478 = vmatpush1.msra.mxu0 0.0
          %479 = vmatprep.subr.mxu0 0.0
          %480 = vmatpush1.msra.mxu0 0.0
          %481 = vmatprep.subr.mxu0 0.0
          %482 = vmatpush1.msra.mxu0 0.0
          %483 = vmatprep.subr.mxu0 0.0
          %484 = vmatpush1.msra.mxu0 0.0
          %485 = vmatprep.subr.mxu0 0.0
          %486 = vmatpush1.msra.mxu0 0.0
          %487 = vmatprep.subr.mxu0 0.0
          %488 = vmatpush1.msra.mxu0 0.0
          %489 = vmatprep.mubr.f32.mxu0 0.0
          %490 = vmatmul.mubr.f32.gmra.mrb[0].mxu0 %v423
          %v491 = vpop.f32.mrb[0].mxu0
          %v492 = vadd.f32 %v420, %v491
          %v493 = vpop.f32.mrb[0].mxu0
          %494 = vdwg.mxu0
          %495 = vst [vmem:[#allocation2] sm:$0x1] %v492
        $region60: #{tpu_custom_call.1} parent=43 // pred_fallthru
          _
        %v496 = vld [vmem:[%s284] sm:$0x3]
        %v497 = vld [vmem:[#allocation2] sm:$0x1]
        %v499 = vlaneseq
        %v500 = vshrl.u32 %v499, 7
        %v501 = vsub.s32 0, %v500
        %v502 = vrot.slane %v497, %v501
        %v504 = vadd.f32 %v496, %v502
        %505 = vst [vmem:[%s323] sm:$0x3] %v504
        %s506 = sand.u32 %s184, 1
        %s507 = scalar_lea.sflag [#allocation5], %s506
        %s508 = sand.u32 %s184, 1
        %s509 = smul.addr %s508, 2
        %s510 = scalar_lea.vmem [#allocation9], %s509
        // Predicated region
        $region61: #{tpu_custom_call.1} parent=43 // pred_check
          %p511 = pneg %p194
        $region62: #{tpu_custom_call.1} parent=43 // pred_check_branch
          %513 = sbr.rel (%p511) target = $region64
        $region63: #{tpu_custom_call.1} parent=43 // pred_region
          %s515 = ssub.s32 32, 32
          %516 = vsyncadd %s507, %s515
          %s517 = sadd.s32 %s29, %s28
          %s518 = smul.addr %s517, 32
          %s519 = scalar_lea.hbm %s6, %s518
          %s521 = sshll.u32 %s510, 4
          %s522 = int_to_ptr.vmem [resolvable:$true] %s521
          %524 = dma.vmem_to_hbm [thread:$0]  %s522, 32, %s519, %s507
        $region64: #{tpu_custom_call.1} parent=43 // pred_fallthru
          _
      $region44: #{tpu_custom_call.1} parent=5 // pred_fallthru
        _
      %p525 = scmp.le.s32.totalorder 2, %s19
      // Predicated region
      $region65: #{tpu_custom_call.1} parent=5 // pred_check
        %p526 = pneg %p525
      $region66: #{tpu_custom_call.1} parent=5 // pred_check_branch
        %528 = sbr.rel (%p526) target = $region68
      $region67: #{tpu_custom_call.1} parent=5 // pred_region
        %s529 = ssub.s32 %s19, 2
        // Predicated region
        $region69: #{tpu_custom_call.1} parent=67 // pred_check
          %p530 = pneg %p200
        $region70: #{tpu_custom_call.1} parent=67 // pred_check_branch
          %532 = sbr.rel (%p530) target = $region72
        $region71: #{tpu_custom_call.1} parent=67 // pred_region
          %s533 = sand.u32 %s185, 1
          %s534 = scalar_lea.sflag [#allocation5], %s533
          %s535 = sand.u32 %s185, 1
          %s536 = smul.addr %s535, 2
          %s537 = scalar_lea.vmem [#allocation9], %s536
          %538 = dma.done %s534, 32
        $region72: #{tpu_custom_call.1} parent=67 // pred_fallthru
          _
      $region68: #{tpu_custom_call.1} parent=5 // pred_fallthru
        _
    $region6: #{tpu_custom_call.1} parent=1 // loop_footer
      %s23 = sadd.s32 1, %s19
    $region7: #{tpu_custom_call.1} parent=1 // loop_footer_branch
      %18 = sbr.rel target = $region3
    $region8: #{tpu_custom_call.1} parent=1 // loop_exit
      _
    %539 = vsyncpa [#allocation4], 1
    %s540 = scalar_lea.sflag [#allocation4], 1
    %541 = vsyncpa %s540, 1
    %542 = vsyncpa [#allocation7], 1
    %543 = vsyncpa [#allocation5], 1
    %s544 = scalar_lea.sflag [#allocation5], 1
    %545 = vsyncpa %s544, 1

</llo_original>
